<compile_context>
chip_gen: v7x
topology: tpu7x:2x2x1
jax: 0.10.0
libtpu: 0.0.40
codegen_flags: <defaults>
</compile_context>

<pallas_src>
import jax
import jax.numpy as jnp
from jax.experimental import pallas as pl
from jax.experimental.pallas import tpu as pltpu


def fused_linear_kernel(x_ref, w_ref, b_ref, o_ref):
    # One batch tile: single MXU matmul (f32 accumulation) + bias broadcast.
    acc = jnp.dot(x_ref[...], w_ref[...], preferred_element_type=jnp.float32)
    o_ref[...] = (acc + b_ref[...]).astype(o_ref.dtype)


def _round_up(n, m):
    return ((n + m - 1) // m) * m


def data_parallel_model_forward(x, params, *, block_b=2048, min_pallas_batch=512,
                                use_bf16=False):
    """x: [B, 10] float32. params: dict of (w1,b1,w2,b2,w3,b3), weights stored [in, out]."""
    w1, b1, w2, b2, w3, b3 = (
        params["w1"], params["b1"],
        params["w2"], params["b2"],
        params["w3"], params["b3"],
    )

    # --- Algebraic fusion of the three affine layers (see tolerance note at top) ---
    w = w1 @ w2 @ w3                      # [10, 20]
    b = (b1 @ w2 + b2) @ w3 + b3          # [1, 20]
    in_dim, out_dim = w.shape
    B = x.shape[0]

    # --- Small-batch bypass: launch + DMA setup dominates; plain XLA is faster ---
    if B < min_pallas_batch:
        return (x @ w + b).astype(jnp.float32)

    # --- Optional bf16 inputs (f32 accumulation, f32 bias/output) ---
    if use_bf16:
        x_k = x.astype(jnp.bfloat16)
        w_k = w.astype(jnp.bfloat16)
    else:
        x_k = x
        w_k = w
    b_k = b.astype(jnp.float32)

    # --- Batch tiling: sublane-aligned; keep >=2 grid steps when the batch permits so the
    #     "parallel" batch axis can shard across both TensorCores on v7x ---
    b_round = _round_up(B, 8)
    half = _round_up((b_round + 1) // 2, 8)
    tb = min(block_b, max(8, half))
    padded_B = _round_up(b_round, tb)
    if padded_B != B:
        # Padded rows are zeros -> they produce just the composed bias and are sliced off
        # below; do NOT remove the [:B] slice or add batch reductions inside the kernel.
        x_k = jnp.pad(x_k, ((0, padded_B - B), (0, 0)))
    grid = (padded_B // tb,)

    out_padded = pl.pallas_call(
        fused_linear_kernel,
        out_shape=jax.ShapeDtypeStruct((padded_B, out_dim), jnp.float32),
        grid_spec=pl.GridSpec(
            grid=grid,
            in_specs=[
                pl.BlockSpec((tb, in_dim), lambda i: (i, 0)),       # x tile, double-buffered
                pl.BlockSpec((in_dim, out_dim), lambda i: (0, 0)),  # composed W, VMEM-resident
                pl.BlockSpec((1, out_dim), lambda i: (0, 0)),       # composed b, VMEM-resident
            ],
            out_specs=pl.BlockSpec((tb, out_dim), lambda i: (i, 0)),
        ),
        compiler_params=pltpu.CompilerParams(
            dimension_semantics=("parallel",),   # megacore sharding of the batch axis on v7x
        ),
    )(x_k, w_k, b_k)

    return out_padded[:B]


def init_params(key):
    """Deterministic init matching nn.Linear shapes (weights stored transposed: [in, out])."""
    k1, k2, k3, k4, k5, k6 = jax.random.split(key, 6)
    # nn.Linear(10, 20)
    w1 = jax.random.normal(k1, (10, 20), jnp.float32) * 0.1
    b1 = jax.random.normal(k2, (1, 20), jnp.float32) * 0.1
    # nn.Linear(20, 20) (wrapped in nn.DataParallel in the original module — forward no-op)
    w2 = jax.random.normal(k3, (20, 20), jnp.float32) * 0.1
    b2 = jax.random.normal(k4, (1, 20), jnp.float32) * 0.1
    # nn.Linear(20, 20)
    w3 = jax.random.normal(k5, (20, 20), jnp.float32) * 0.1
    b3 = jax.random.normal(k6, (1, 20), jnp.float32) * 0.1
    return {"w1": w1, "b1": b1, "w2": w2, "b2": b2, "w3": w3, "b3": b3}


def _reference(x, params):
    ref = x @ params["w1"] + params["b1"]
    ref = ref @ params["w2"] + params["b2"]
    ref = ref @ params["w3"] + params["b3"]
    return ref


if __name__ == "__main__":
    key = jax.random.PRNGKey(0)
    kx, kx2, kp = jax.random.split(key, 3)
    params = init_params(kp)

    # 1) Small batch, forced through the Pallas kernel (min_pallas_batch=0).
    batch = 8
    x = jax.random.normal(kx, (batch, 10), jnp.float32)
    out = jax.block_until_ready(
        data_parallel_model_forward(x, params, min_pallas_batch=0))
    ref = _reference(x, params)
    assert out.shape == (batch, 20), out.shape
    assert jnp.allclose(out, ref, atol=1e-4, rtol=1e-4), "mismatch vs reference (B=8)"

    # 2) Non-multiple-of-8 batch -> exercises padding + a multi-step ("parallel") grid.
    batch2 = 100
    x2 = jax.random.normal(kx2, (batch2, 10), jnp.float32)
    out2 = jax.block_until_ready(
        data_parallel_model_forward(x2, params, min_pallas_batch=0))
    ref2 = _reference(x2, params)
    assert out2.shape == (batch2, 20), out2.shape
    assert jnp.allclose(out2, ref2, atol=1e-4, rtol=1e-4), "mismatch vs reference (B=100)"

    print("KERNEL_OK")
</pallas_src>

<mosaic_0001>
module attributes {stable_mosaic.version = 11 : i64} {
  func.func @fused_linear_kernel(%arg0: i32, %arg1: memref<8x10xf32, #tpu.memory_space<vmem>>, %arg2: memref<10x20xf32, #tpu.memory_space<vmem>>, %arg3: memref<1x20xf32, #tpu.memory_space<vmem>>, %arg4: memref<8x20xf32, #tpu.memory_space<vmem>>) attributes {dimension_semantics = [#tpu.dimension_semantics<parallel>], iteration_bounds = array<i64: 1>, scalar_prefetch = 0 : i64, scratch_operands = 0 : i64, tpu.core_type = #tpu.core_type<tc>, window_params = [{transform_indices = @transform_0, window_bounds = array<i64: 8, 10>}, {pipeline_mode = #tpu.pipeline_mode<synchronous>, transform_indices = @transform_1, window_bounds = array<i64: 10, 20>}, {pipeline_mode = #tpu.pipeline_mode<synchronous>, transform_indices = @transform_2, window_bounds = array<i64: 1, 20>}, {transform_indices = @transform_3, window_bounds = array<i64: 8, 20>}]} {
    %c0 = arith.constant 0 : index
    %c0_0 = arith.constant 0 : index
    %0 = vector.load %arg1[%c0, %c0_0] : memref<8x10xf32, #tpu.memory_space<vmem>>, vector<8x10xf32>
    %c0_1 = arith.constant 0 : index
    %c0_2 = arith.constant 0 : index
    %1 = vector.load %arg2[%c0_1, %c0_2] : memref<10x20xf32, #tpu.memory_space<vmem>>, vector<10x20xf32>
    %cst = arith.constant dense<0.000000e+00> : vector<8x20xf32>
    %2 = tpu.matmul %0, %1, %cst {dimension_numbers = #tpu.dot_dimension_numbers<[1], [0], [0], [1], [0, 0, 1, 1], [], []>} : vector<8x10xf32>, vector<10x20xf32>, vector<8x20xf32> -> vector<8x20xf32>
    %c0_3 = arith.constant 0 : index
    %c0_4 = arith.constant 0 : index
    %3 = vector.load %arg3[%c0_3, %c0_4] : memref<1x20xf32, #tpu.memory_space<vmem>>, vector<1x20xf32>
    %4 = vector.broadcast %3 : vector<1x20xf32> to vector<8x20xf32>
    %5 = arith.addf %2, %4 : vector<8x20xf32>
    %c0_5 = arith.constant 0 : index
    %c0_6 = arith.constant 0 : index
    %6 = vector.load %arg4[%c0_5, %c0_6] : memref<8x20xf32, #tpu.memory_space<vmem>>, vector<8x20xf32>
    tpu.vector_store %arg4[%c0_5, %c0_6], %5 {strides = array<i32>} : memref<8x20xf32, #tpu.memory_space<vmem>>, vector<8x20xf32>,
    return
  }
  func.func @transform_0(%arg0: i32) -> (i32, i32) {
    %c0_i32 = arith.constant 0 : i32
    %c0_i32_0 = arith.constant 0 : i32
    return %arg0, %c0_i32 : i32, i32
  }
  func.func @transform_1(%arg0: i32) -> (i32, i32) {
    %c0_i32 = arith.constant 0 : i32
    %c0_i32_0 = arith.constant 0 : i32
    %c0_i32_1 = arith.constant 0 : i32
    return %c0_i32, %c0_i32_0 : i32, i32
  }
  func.func @transform_2(%arg0: i32) -> (i32, i32) {
    %c0_i32 = arith.constant 0 : i32
    %c0_i32_0 = arith.constant 0 : i32
    %c0_i32_1 = arith.constant 0 : i32
    return %c0_i32, %c0_i32_0 : i32, i32
  }
  func.func @transform_3(%arg0: i32) -> (i32, i32) {
    %c0_i32 = arith.constant 0 : i32
    %c0_i32_0 = arith.constant 0 : i32
    return %arg0, %c0_i32 : i32, i32
  }
}

</mosaic_0001>

<llo_original>
// kernel: tpu_custom_call.1
$region0: #{tpu_custom_call.1}
  #allocation0 [shape = 'u32[]', space=smem, size = 0x4, offset = 0x4, fixed_abs, tag = 'smem constant byte address 0x4 - core index']
  #allocation1 [shape = 'u32[144,128]{1,0:T(1,128)}', space=vmem, size = 0x12000, scoped, tag = 'internal scratch']
  %s0 = inlined_call_operand.hbm [shape: f32[8,10], index: 0, kind: input, shape index: {}]
  %s1 = inlined_call_operand.hbm [shape: f32[10,20], index: 1, kind: input, shape index: {}]
  %s2 = inlined_call_operand.vmem [shape: f32[1,20], index: 2, kind: input, shape index: {}]
  %s3 = inlined_call_operand.hbm [shape: f32[8,20], index: 3, kind: output, shape index: {}]
  %s4 = sld [smem:[#allocation0]]
  $region30: #{tpu_custom_call.1} parent=0
    _
  %s6 = ssub.s32 1, %s4
  %s7 = scalar_select 0, %s6, %s4
  $region1: #{tpu_custom_call.1} parent=0
    #allocation2 [shape = 'u8[4096]{0}', space=vmem, size = 0x1000, scoped, tag = 'input window, operand 0, single buffered']
    #allocation3 [shape = 's32[1]{0}', space=sflag, size = 0x4, scoped, tag = 'scoped memory for tpu_custom_call.1']
    #allocation4 [shape = 's32[1]{0}', space=sflag, size = 0x4, scoped, tag = 'scoped memory for tpu_custom_call.1']
    #allocation5 [shape = 'u8[8192]{0}', space=vmem, size = 0x2000, scoped, tag = 'input window, operand 1, single buffered']
    #allocation6 [shape = 's32[1]{0}', space=sflag, size = 0x4, scoped, tag = 'scoped memory for tpu_custom_call.1']
    #allocation7 [shape = 'u8[4096]{0}', space=vmem, size = 0x1000, scoped, tag = 'output window, operand 0, single buffered']
    %8 = vsyncpa [#allocation3], 0
    %9 = vsyncpa [#allocation6], 0
    %10 = vsyncpa [#allocation4], 0
    // Predicated region
    $region2: #{tpu_custom_call.1} parent=1 // pred_check
      _
    $region3: #{tpu_custom_call.1} parent=1 // pred_check_branch
      %12 = sbr.rel (0) target = $region5
    $region4: #{tpu_custom_call.1} parent=1 // pred_region
      %s14 = ssub.s32 128, 128
      %15 = vsyncadd [#allocation3], %s14
      %s17 = sshll.u32 [#allocation2], 4
      %s18 = int_to_ptr.vmem [resolvable:$true] %s17
      %20 = dma.hbm_to_vmem [thread:$0]  %s0, 128, %s18, [#allocation3]
    $region5: #{tpu_custom_call.1} parent=1 // pred_fallthru
      _
    // Predicated region
    $region6: #{tpu_custom_call.1} parent=1 // pred_check
      _
    $region7: #{tpu_custom_call.1} parent=1 // pred_check_branch
      %22 = sbr.rel (0) target = $region9
    $region8: #{tpu_custom_call.1} parent=1 // pred_region
      %s24 = ssub.s32 256, 256
      %25 = vsyncadd [#allocation6], %s24
      %s26 = sshll.u32 [#allocation5], 4
      %s27 = int_to_ptr.vmem [resolvable:$true] %s26
      %32 = dma.hbm_to_vmem [thread:$0]  %s1, 256, %s27, [#allocation6], 128, 128, 8
    $region9: #{tpu_custom_call.1} parent=1 // pred_fallthru
      _
    // Predicated region
    $region10: #{tpu_custom_call.1} parent=1 // pred_check
      _
    $region11: #{tpu_custom_call.1} parent=1 // pred_check_branch
      %34 = sbr.rel (0) target = $region13
    $region12: #{tpu_custom_call.1} parent=1 // pred_region
      _
    $region13: #{tpu_custom_call.1} parent=1 // pred_fallthru
      _
    // Predicated region
    $region14: #{tpu_custom_call.1} parent=1 // pred_check
      _
    $region15: #{tpu_custom_call.1} parent=1 // pred_check_branch
      %36 = sbr.rel (0) target = $region17
    $region16: #{tpu_custom_call.1} parent=1 // pred_region
      %37 = dma.done [#allocation3], 128
    $region17: #{tpu_custom_call.1} parent=1 // pred_fallthru
      _
    // Predicated region
    $region18: #{tpu_custom_call.1} parent=1 // pred_check
      _
    $region19: #{tpu_custom_call.1} parent=1 // pred_check_branch
      %39 = sbr.rel (0) target = $region21
    $region20: #{tpu_custom_call.1} parent=1 // pred_region
      %40 = dma.done [#allocation6], 256
    $region21: #{tpu_custom_call.1} parent=1 // pred_fallthru
      _
    %v41 = vld [vmem:[#allocation2] sm:$0xff]
    %v42 = vld [vmem:[#allocation5] sm:$0xff]
    %v43 = vld [vmem:[#allocation5 + $0x8] sm:$0x3]
    %v44 = vld [vmem:[%s2] sm:$0x1]
    %v46 = vlaneseq
    %v47 = vshrl.u32 %v46, 7
    %v48 = vsub.s32 0, %v47
    %v49 = vrot.slane %v44, %v48
    %vm51 = vcmask 80896
    %v53 = vsel %vm51, %v41, 0
    %vm55 = vcmask 1041408
    %v57 = vsel %vm55, %v43, 0
    %59 = vmatprep.subr.mxu0 0.0
    %60 = vmatpush1.msra.mxu0 %v42
    %61 = vmatprep.subr.mxu0 0.0
    %62 = vmatpush1.msra.mxu0 %v57
    %63 = vmatprep.subr.mxu0 0.0
    %64 = vmatpush1.msra.mxu0 0.0
    %65 = vmatprep.subr.mxu0 0.0
    %66 = vmatpush1.msra.mxu0 0.0
    %67 = vmatprep.subr.mxu0 0.0
    %68 = vmatpush1.msra.mxu0 0.0
    %69 = vmatprep.subr.mxu0 0.0
    %70 = vmatpush1.msra.mxu0 0.0
    %71 = vmatprep.subr.mxu0 0.0
    %72 = vmatpush1.msra.mxu0 0.0
    %73 = vmatprep.subr.mxu0 0.0
    %74 = vmatpush1.msra.mxu0 0.0
    %75 = vmatprep.subr.mxu0 0.0
    %76 = vmatpush1.msra.mxu0 0.0
    %77 = vmatprep.subr.mxu0 0.0
    %78 = vmatpush1.msra.mxu0 0.0
    %79 = vmatprep.subr.mxu0 0.0
    %80 = vmatpush1.msra.mxu0 0.0
    %81 = vmatprep.subr.mxu0 0.0
    %82 = vmatpush1.msra.mxu0 0.0
    %83 = vmatprep.subr.mxu0 0.0
    %84 = vmatpush1.msra.mxu0 0.0
    %85 = vmatprep.subr.mxu0 0.0
    %86 = vmatpush1.msra.mxu0 0.0
    %87 = vmatprep.subr.mxu0 0.0
    %88 = vmatpush1.msra.mxu0 0.0
    %89 = vmatprep.subr.mxu0 0.0
    %90 = vmatpush1.msra.mxu0 0.0
    %91 = vmatprep.subr.mxu0 0.0
    %92 = vmatpush1.msra.mxu0 0.0
    %93 = vmatprep.subr.mxu0 0.0
    %94 = vmatpush1.msra.mxu0 0.0
    %95 = vmatprep.subr.mxu0 0.0
    %96 = vmatpush1.msra.mxu0 0.0
    %97 = vmatprep.subr.mxu0 0.0
    %98 = vmatpush1.msra.mxu0 0.0
    %99 = vmatprep.subr.mxu0 0.0
    %100 = vmatpush1.msra.mxu0 0.0
    %101 = vmatprep.subr.mxu0 0.0
    %102 = vmatpush1.msra.mxu0 0.0
    %103 = vmatprep.subr.mxu0 0.0
    %104 = vmatpush1.msra.mxu0 0.0
    %105 = vmatprep.subr.mxu0 0.0
    %106 = vmatpush1.msra.mxu0 0.0
    %107 = vmatprep.subr.mxu0 0.0
    %108 = vmatpush1.msra.mxu0 0.0
    %109 = vmatprep.subr.mxu0 0.0
    %110 = vmatpush1.msra.mxu0 0.0
    %111 = vmatprep.subr.mxu0 0.0
    %112 = vmatpush1.msra.mxu0 0.0
    %113 = vmatprep.subr.mxu0 0.0
    %114 = vmatpush1.msra.mxu0 0.0
    %115 = vmatprep.subr.mxu0 0.0
    %116 = vmatpush1.msra.mxu0 0.0
    %117 = vmatprep.subr.mxu0 0.0
    %118 = vmatpush1.msra.mxu0 0.0
    %119 = vmatprep.subr.mxu0 0.0
    %120 = vmatpush1.msra.mxu0 0.0
    %121 = vmatprep.subr.mxu0 0.0
    %122 = vmatpush1.msra.mxu0 0.0
    %123 = vmatprep.mubr.f32.mxu0 0.0
    %124 = vmatmul.mubr.f32.gmra.mrb[0].mxu0 %v53
    %v125 = vpop.f32.mrb[0].mxu0
    %v126 = vadd.f32 %v49, %v125
    %v127 = vpop.f32.mrb[0].mxu0
    %128 = vdwg.mxu0
    %vm129 = vcmask 162816
    %130 = vst.msk [vmem:[#allocation7] sm:$0xff] %vm129, %v126
    // Predicated region
    $region22: #{tpu_custom_call.1} parent=1 // pred_check
      _
    $region23: #{tpu_custom_call.1} parent=1 // pred_check_branch
      %132 = sbr.rel (0) target = $region25
    $region24: #{tpu_custom_call.1} parent=1 // pred_region
      %s134 = ssub.s32 128, 128
      %135 = vsyncadd [#allocation4], %s134
      %s137 = sshll.u32 [#allocation7], 4
      %s138 = int_to_ptr.vmem [resolvable:$true] %s137
      %140 = dma.vmem_to_hbm [thread:$0]  %s138, 128, %s3, [#allocation4]
    $region25: #{tpu_custom_call.1} parent=1 // pred_fallthru
      _
    // Predicated region
    $region26: #{tpu_custom_call.1} parent=1 // pred_check
      _
    $region27: #{tpu_custom_call.1} parent=1 // pred_check_branch
      %142 = sbr.rel (0) target = $region29
    $region28: #{tpu_custom_call.1} parent=1 // pred_region
      %143 = dma.done [#allocation4], 128
    $region29: #{tpu_custom_call.1} parent=1 // pred_fallthru
      _
    %144 = vsyncpa [#allocation3], 1
    %145 = vsyncpa [#allocation6], 1
    %146 = vsyncpa [#allocation4], 1

</llo_original>
